<compile_context>
chip_gen: v7x
topology: tpu7x:2x2x1
jax: 0.10.0
libtpu: 0.0.40
codegen_flags: <defaults>
</compile_context>

<pallas_src>
import functools

import jax
import jax.numpy as jnp
from jax.experimental import pallas as pl
from jax.experimental.pallas import tpu as pltpu


# ---------------------------------------------------------------------------
# small helpers
# ---------------------------------------------------------------------------
def _cdiv(a, b):
    return (a + b - 1) // b


def _round_up(a, b):
    return _cdiv(a, b) * b


def _vmem_capacity_bytes():
    """Physical VMEM per TensorCore (generation-aware), with a safe fallback."""
    try:
        info = pltpu.get_tpu_info()
        cap = getattr(info, "vmem_capacity_bytes", None)
        if cap:
            return int(cap)
    except Exception:
        pass
    return 64 << 20  # conservative (v7x-sized); also valid on v5e/v6e


def _select_tI(H, I, w_dtype, vmem_cap):
    """Lane-aligned intermediate tile sized so the double-buffered weight tiles
    ((H, 2*tI) gate|up + (tI, H) down, x2 buffers each) stay within ~45% of VMEM.
    ~256 on v7x (64 MiB) and ~512 on v5e/v6e (128 MiB) for H=8192 bf16."""
    w_is = jnp.dtype(w_dtype).itemsize
    budget = int(0.45 * vmem_cap)
    tI = budget // (6 * H * w_is)
    tI = max(128, (tI // 128) * 128)
    tI = min(tI, 2048, _round_up(I, 128))
    return int(tI)


def _select_tm(T, x_dtype, vmem_cap):
    """Token tile: sublane-aligned, larger for prefill on 128 MiB-VMEM chips to
    amortize the weight stream, and guaranteeing >=2 token tiles whenever T allows
    so the v7x megacore 'parallel' axis feeds both TensorCores."""
    sublane = max(8, 32 // jnp.dtype(x_dtype).itemsize)
    tm_target = 512 if (vmem_cap >= (100 << 20) and T >= 512) else 256
    n_tiles = _cdiv(T, tm_target)
    if T >= 2 * sublane:
        n_tiles = max(n_tiles, 2)
    tm = _round_up(_cdiv(T, n_tiles), sublane)
    return int(tm)


# ---------------------------------------------------------------------------
# one-time weight re-layout (weight-load time, NOT the per-call path)
# ---------------------------------------------------------------------------
def prepare_xverse_mlp_weights(w_gate, w_up, w_down, *, tI=None):
    """Re-lay the MLP weights block-major. Call ONCE when loading weights.

    w_gate / w_up: (H, I)   (i.e. gate_up_proj.weight[:I].T / [I:].T)
    w_down:        (I, H)   (i.e. down_proj.weight.T)

    Returns:
      w_gu_blocks: (kb, H, 2*tI) where slab k = [gate_k | up_k] (contiguous DMA per k)
      w_dn_blocks: (kb, tI, H)
    The intermediate dim is zero-padded to a multiple of tI; silu(0)*0 == 0, so the
    padded columns contribute nothing to the output.
    """
    H, I = w_gate.shape
    assert w_up.shape == (H, I) and w_down.shape == (I, H)
    if tI is None:
        tI = _select_tI(H, I, w_gate.dtype, _vmem_capacity_bytes())
    I_pad = _round_up(I, tI)
    if I_pad != I:
        pad = I_pad - I
        w_gate = jnp.pad(w_gate, ((0, 0), (0, pad)))
        w_up = jnp.pad(w_up, ((0, 0), (0, pad)))
        w_down = jnp.pad(w_down, ((0, pad), (0, 0)))
    kb = I_pad // tI
    w_gu_blocks = jnp.concatenate(
        [w_gate.reshape(H, kb, tI).transpose(1, 0, 2),
         w_up.reshape(H, kb, tI).transpose(1, 0, 2)],
        axis=-1,
    )  # (kb, H, 2*tI)
    w_dn_blocks = w_down.reshape(kb, tI, H)
    return w_gu_blocks, w_dn_blocks


# ---------------------------------------------------------------------------
# kernel
# ---------------------------------------------------------------------------
def _xverse_mlp_kernel(x_ref, wgu_ref, wd_ref, o_ref, acc_ref, *, tI):
    k = pl.program_id(1)

    @pl.when(k == 0)
    def _():
        acc_ref[...] = jnp.zeros_like(acc_ref)

    x = x_ref[...]                                                    # (tm, H)
    # One merged matmul covers gate and up for this I-block: (tm, 2*tI).
    gu = jnp.dot(x, wgu_ref[...], preferred_element_type=jnp.float32)
    gate = gu[:, :tI]
    up = gu[:, tI:]
    # SiluAndMul in f32 (sigmoid goes to the EUP slot).
    h = (gate * jax.nn.sigmoid(gate)) * up                            # (tm, tI) f32
    # Partial down-projection for this I-block, accumulated in f32.
    # NOTE: casting h to the weight dtype (e.g. bf16) is a deliberate inference-time
    # precision trade-off; accumulation stays f32.
    acc_ref[...] += jnp.dot(h.astype(wd_ref.dtype), wd_ref[...],
                            preferred_element_type=jnp.float32)

    @pl.when(k == pl.num_programs(1) - 1)
    def _():
        o_ref[...] = acc_ref[...].astype(o_ref.dtype)


# ---------------------------------------------------------------------------
# per-call path
# ---------------------------------------------------------------------------
@functools.partial(jax.jit, static_argnames=("tm", "vmem_limit"))
def _xverse_mlp_call(x, w_gu_blocks, w_dn_blocks, *, tm, vmem_limit):
    T, H = x.shape
    kb, Hw, two_tI = w_gu_blocks.shape
    tI = two_tI // 2
    assert Hw == H and w_dn_blocks.shape == (kb, tI, H)

    T_pad = _round_up(T, tm)
    if T_pad != T:
        x = jnp.pad(x, ((0, T_pad - T), (0, 0)))

    x_is = jnp.dtype(x.dtype).itemsize
    I_pad = kb * tI
    cost = pl.CostEstimate(
        flops=6 * T_pad * H * I_pad,
        transcendentals=T_pad * I_pad,
        bytes_accessed=int(x.nbytes + w_gu_blocks.nbytes + w_dn_blocks.nbytes
                           + T_pad * H * x_is),
    )

    out = pl.pallas_call(
        functools.partial(_xverse_mlp_kernel, tI=tI),
        out_shape=jax.ShapeDtypeStruct((T_pad, H), x.dtype),
        grid_spec=pltpu.PrefetchScalarGridSpec(
            num_scalar_prefetch=0,
            grid=(T_pad // tm, kb),
            in_specs=[
                pl.BlockSpec((tm, H), lambda i, k: (i, 0)),               # x tile
                pl.BlockSpec((None, H, 2 * tI), lambda i, k: (k, 0, 0)),  # [gate|up]_k
                pl.BlockSpec((None, tI, H), lambda i, k: (k, 0, 0)),      # down_k
            ],
            out_specs=pl.BlockSpec((tm, H), lambda i, k: (i, 0)),
            scratch_shapes=[pltpu.VMEM((tm, H), jnp.float32)],
        ),
        compiler_params=pltpu.CompilerParams(
            dimension_semantics=("parallel", "arbitrary"),
            vmem_limit_bytes=vmem_limit,
        ),
        cost_estimate=cost,
    )(x, w_gu_blocks, w_dn_blocks)

    return out[:T] if T_pad != T else out


def xverse_mlp(x, w_gu_blocks, w_dn_blocks, *, tm=None):
    """XverseMLP forward: down_proj(silu(x @ w_gate) * (x @ w_up)).

    x: (T, H). Weights must be pre-laid-out with prepare_xverse_mlp_weights()
    (done once at weight-load time so no concatenate/reshape HBM traffic happens
    per forward call). Returns (T, H) in x.dtype.
    """
    T, H = x.shape
    kb, Hw, two_tI = w_gu_blocks.shape
    assert Hw == H
    tI = two_tI // 2
    vmem_cap = _vmem_capacity_bytes()
    if tm is None:
        tm = _select_tm(T, x.dtype, vmem_cap)

    x_is = jnp.dtype(x.dtype).itemsize
    w_is = jnp.dtype(w_gu_blocks.dtype).itemsize
    vmem_est = (
        2 * tm * H * x_is            # x tile (double buffered)
        + 2 * H * 2 * tI * w_is      # merged [gate|up] weight tile (double buffered)
        + 2 * tI * H * w_is          # down-proj weight tile (double buffered)
        + 2 * tm * H * x_is          # output tile (double buffered)
        + tm * H * 4                 # f32 accumulator scratch
        + tm * 2 * tI * 4            # in-flight f32 intermediate
    )
    if vmem_est > int(0.85 * vmem_cap):
        raise ValueError(
            f"tile config (tm={tm}, tI={tI}) needs ~{vmem_est >> 20} MiB VMEM but only "
            f"{vmem_cap >> 20} MiB is available on this chip; re-run "
            "prepare_xverse_mlp_weights with a smaller tI or pass a smaller tm.")
    vmem_limit = int(min(max(vmem_est * 3 // 2, 32 << 20), int(0.9 * vmem_cap)))

    return _xverse_mlp_call(x, w_gu_blocks, w_dn_blocks, tm=int(tm),
                            vmem_limit=vmem_limit)


# ---------------------------------------------------------------------------
# reference + self-test
# ---------------------------------------------------------------------------
def _reference(x, w_gate, w_up, w_down):
    gate = x @ w_gate
    up = x @ w_up
    return (jax.nn.silu(gate) * up) @ w_down


if __name__ == "__main__":
    # Small shapes consistent with the module. I=200 is deliberately not a multiple of
    # 128 to exercise the zero-padded intermediate path; T=16 yields two token tiles
    # (parallel axis) with the default tm heuristic.
    T, H, I = 16, 128, 200
    key = jax.random.PRNGKey(0)
    kx, kgu, kd = jax.random.split(key, 3)

    x = jax.random.normal(kx, (T, H), dtype=jnp.float32)

    # Mirror PyTorch layout: gate_up_proj.weight (2*I, H); down_proj.weight (H, I).
    gate_up_w = jax.random.normal(kgu, (2 * I, H), dtype=jnp.float32) * 0.05
    down_w = jax.random.normal(kd, (H, I), dtype=jnp.float32) * 0.05

    w_gate = gate_up_w[:I, :].T   # (H, I)
    w_up = gate_up_w[I:, :].T     # (H, I)
    w_down = down_w.T             # (I, H)

    ref = _reference(x, w_gate, w_up, w_down)

    # Explicit small tiles: grid (2 token tiles x 2 I-blocks), I padded 200->256;
    # exercises accumulator init/flush and the block-major merged [gate|up] slabs.
    w_gu_b, w_dn_b = prepare_xverse_mlp_weights(w_gate, w_up, w_down, tI=128)
    out = jax.block_until_ready(xverse_mlp(x, w_gu_b, w_dn_b, tm=8))
    assert out.shape == (T, H)
    assert jnp.allclose(out, ref, atol=2e-3, rtol=2e-3), "mismatch vs reference (tiled)"

    # Default heuristics (weights re-laid-out once at 'load time', default tI/tm).
    w_gu_d, w_dn_d = prepare_xverse_mlp_weights(w_gate, w_up, w_down)
    out2 = jax.block_until_ready(xverse_mlp(x, w_gu_d, w_dn_d))
    assert out2.shape == (T, H)
    assert jnp.allclose(out2, ref, atol=2e-3, rtol=2e-3), "mismatch vs reference (default)"

    print("KERNEL_OK")
</pallas_src>

<mosaic_0001>
module attributes {stable_mosaic.version = 11 : i64} {
  func.func @_xverse_mlp_kernel(%arg0: i32, %arg1: i32, %arg2: memref<8x128xf32, #tpu.memory_space<vmem>>, %arg3: memref<1x128x256xf32, #tpu.memory_space<vmem>>, %arg4: memref<1x128x128xf32, #tpu.memory_space<vmem>>, %arg5: memref<8x128xf32, #tpu.memory_space<vmem>>, %arg6: memref<8x128xf32, #tpu.memory_space<vmem>>) attributes {dimension_semantics = [#tpu.dimension_semantics<parallel>, #tpu.dimension_semantics<arbitrary>], iteration_bounds = array<i64: 2, 2>, scalar_prefetch = 0 : i64, scratch_operands = 1 : i64, tpu.core_type = #tpu.core_type<tc>, window_params = [{transform_indices = @transform_0, window_bounds = array<i64: 8, 128>}, {transform_indices = @transform_1, window_bounds = array<i64: 1, 128, 256>}, {transform_indices = @transform_2, window_bounds = array<i64: 1, 128, 128>}, {transform_indices = @transform_3, window_bounds = array<i64: 8, 128>}]} {
    %c0_i32 = arith.constant 0 : i32
    %0 = arith.cmpi eq, %arg1, %c0_i32 : i32
    %1 = arith.extui %0 : i1 to i32
    %c0_i32_0 = arith.constant 0 : i32
    %2 = arith.cmpi ne, %1, %c0_i32_0 : i32
    scf.if %2 {
      %cst_15 = arith.constant 0.000000e+00 : f32
      %25 = vector.broadcast %cst_15 : f32 to vector<8x128xf32>
      %c0_16 = arith.constant 0 : index
      %c0_17 = arith.constant 0 : index
      %26 = vector.load %arg6[%c0_16, %c0_17] : memref<8x128xf32, #tpu.memory_space<vmem>>, vector<8x128xf32>
      tpu.vector_store %arg6[%c0_16, %c0_17], %25 {strides = array<i32>} : memref<8x128xf32, #tpu.memory_space<vmem>>, vector<8x128xf32>,
    } else {
    }
    %c0 = arith.constant 0 : index
    %c0_1 = arith.constant 0 : index
    %3 = vector.load %arg2[%c0, %c0_1] : memref<8x128xf32, #tpu.memory_space<vmem>>, vector<8x128xf32>
    %c0_2 = arith.constant 0 : index
    %c0_3 = arith.constant 0 : index
    %c0_4 = arith.constant 0 : index
    %4 = vector.load %arg3[%c0_2, %c0_3, %c0_4] : memref<1x128x256xf32, #tpu.memory_space<vmem>>, vector<1x128x256xf32>
    %5 = vector.shape_cast %4 : vector<1x128x256xf32> to vector<128x256xf32>
    %cst = arith.constant dense<0.000000e+00> : vector<8x256xf32>
    %6 = tpu.matmul %3, %5, %cst {dimension_numbers = #tpu.dot_dimension_numbers<[1], [0], [0], [1], [0, 0, 1, 1], [], []>} : vector<8x128xf32>, vector<128x256xf32>, vector<8x256xf32> -> vector<8x256xf32>
    %7 = vector.extract_strided_slice %6 {offsets = [0, 0], sizes = [8, 128], strides = [1, 1]} : vector<8x256xf32> to vector<8x128xf32>
    %8 = vector.extract_strided_slice %6 {offsets = [0, 128], sizes = [8, 128], strides = [1, 1]} : vector<8x256xf32> to vector<8x128xf32>
    %9 = arith.negf %7 : vector<8x128xf32>
    %10 = math.exp %9 : vector<8x128xf32>
    %cst_5 = arith.constant 1.000000e+00 : f32
    %11 = vector.broadcast %cst_5 : f32 to vector<8x128xf32>
    %12 = arith.addf %11, %10 : vector<8x128xf32>
    %13 = arith.divf %11, %12 : vector<8x128xf32>
    %14 = arith.mulf %7, %13 : vector<8x128xf32>
    %15 = arith.mulf %14, %8 : vector<8x128xf32>
    %c0_6 = arith.constant 0 : index
    %c0_7 = arith.constant 0 : index
    %16 = vector.load %arg6[%c0_6, %c0_7] : memref<8x128xf32, #tpu.memory_space<vmem>>, vector<8x128xf32>
    %c0_8 = arith.constant 0 : index
    %c0_9 = arith.constant 0 : index
    %c0_10 = arith.constant 0 : index
    %17 = vector.load %arg4[%c0_8, %c0_9, %c0_10] : memref<1x128x128xf32, #tpu.memory_space<vmem>>, vector<1x128x128xf32>
    %18 = vector.shape_cast %17 : vector<1x128x128xf32> to vector<128x128xf32>
    %cst_11 = arith.constant dense<0.000000e+00> : vector<8x128xf32>
    %19 = tpu.matmul %15, %18, %cst_11 {dimension_numbers = #tpu.dot_dimension_numbers<[1], [0], [0], [1], [0, 0, 1, 1], [], []>} : vector<8x128xf32>, vector<128x128xf32>, vector<8x128xf32> -> vector<8x128xf32>
    %20 = arith.addf %16, %19 : vector<8x128xf32>
    %c0_12 = arith.constant 0 : index
    %c0_13 = arith.constant 0 : index
    %21 = vector.load %arg6[%c0_12, %c0_13] : memref<8x128xf32, #tpu.memory_space<vmem>>, vector<8x128xf32>
    tpu.vector_store %arg6[%c0_12, %c0_13], %20 {strides = array<i32>} : memref<8x128xf32, #tpu.memory_space<vmem>>, vector<8x128xf32>,
    %c1_i32 = arith.constant 1 : i32
    %22 = arith.cmpi eq, %arg1, %c1_i32 : i32
    %23 = arith.extui %22 : i1 to i32
    %c0_i32_14 = arith.constant 0 : i32
    %24 = arith.cmpi ne, %23, %c0_i32_14 : i32
    scf.if %24 {
      %c0_15 = arith.constant 0 : index
      %c0_16 = arith.constant 0 : index
      %25 = vector.load %arg6[%c0_15, %c0_16] : memref<8x128xf32, #tpu.memory_space<vmem>>, vector<8x128xf32>
      %c0_17 = arith.constant 0 : index
      %c0_18 = arith.constant 0 : index
      %26 = vector.load %arg5[%c0_17, %c0_18] : memref<8x128xf32, #tpu.memory_space<vmem>>, vector<8x128xf32>
      tpu.vector_store %arg5[%c0_17, %c0_18], %25 {strides = array<i32>} : memref<8x128xf32, #tpu.memory_space<vmem>>, vector<8x128xf32>,
    } else {
    }
    return
  }
  func.func @transform_0(%arg0: i32, %arg1: i32) -> (i32, i32) {
    %c0_i32 = arith.constant 0 : i32
    %c0_i32_0 = arith.constant 0 : i32
    return %arg0, %c0_i32 : i32, i32
  }
  func.func @transform_1(%arg0: i32, %arg1: i32) -> (i32, i32, i32) {
    %c0_i32 = arith.constant 0 : i32
    %c0_i32_0 = arith.constant 0 : i32
    %c0_i32_1 = arith.constant 0 : i32
    return %arg1, %c0_i32, %c0_i32_0 : i32, i32, i32
  }
  func.func @transform_2(%arg0: i32, %arg1: i32) -> (i32, i32, i32) {
    %c0_i32 = arith.constant 0 : i32
    %c0_i32_0 = arith.constant 0 : i32
    %c0_i32_1 = arith.constant 0 : i32
    return %arg1, %c0_i32, %c0_i32_0 : i32, i32, i32
  }
  func.func @transform_3(%arg0: i32, %arg1: i32) -> (i32, i32) {
    %c0_i32 = arith.constant 0 : i32
    %c0_i32_0 = arith.constant 0 : i32
    return %arg0, %c0_i32 : i32, i32
  }
}

</mosaic_0001>

<llo_original>
// kernel: _xverse_mlp_call.1
$region0: #{_xverse_mlp_call.1}
  #allocation0 [shape = 'u32[]', space=smem, size = 0x4, offset = 0x4, fixed_abs, tag = 'smem constant byte address 0x4 - core index']
  #allocation1 [shape = 'u32[144,128]{1,0:T(1,128)}', space=vmem, size = 0x12000, scoped, tag = 'internal scratch']
  #allocation2 [shape = 'f32[8,128]{1,0:T(8,128)}', space=vmem, size = 0x1000, scoped, tag = 'scratch operand']
  %s0 = inlined_call_operand.hbm [shape: f32[16,128], index: 0, kind: input, shape index: {}]
  %s1 = inlined_call_operand.hbm [shape: f32[2,128,256], index: 1, kind: input, shape index: {}]
  %s2 = inlined_call_operand.hbm [shape: f32[2,128,128], index: 2, kind: input, shape index: {}]
  %s3 = inlined_call_operand.hbm [shape: f32[16,128], index: 3, kind: output, shape index: {}]
  %s4 = sld [smem:[#allocation0]]
  $region65: #{_xverse_mlp_call.1} parent=0
    _
  %s6 = ssub.s32 1, %s4
  %s7 = scalar_select 0, %s6, %s4
  $region1: #{_xverse_mlp_call.1} parent=0
    #allocation3 [shape = 'u8[8192]{0}', space=vmem, size = 0x2000, scoped, tag = 'input window, operand 0']
    #allocation4 [shape = 's32[2]{0}', space=sflag, size = 0x8, scoped, tag = 'scoped memory for _xverse_mlp_call.1']
    #allocation5 [shape = 's32[2]{0}', space=sflag, size = 0x8, scoped, tag = 'scoped memory for _xverse_mlp_call.1']
    #allocation6 [shape = 'u8[262144]{0}', space=vmem, size = 0x40000, scoped, tag = 'input window, operand 1']
    #allocation7 [shape = 's32[2]{0}', space=sflag, size = 0x8, scoped, tag = 'scoped memory for _xverse_mlp_call.1']
    #allocation8 [shape = 'u8[131072]{0}', space=vmem, size = 0x20000, scoped, tag = 'input window, operand 2']
    #allocation9 [shape = 'u8[8192]{0}', space=vmem, size = 0x2000, scoped, tag = 'output window, operand 0']
    %8 = vsyncpa [#allocation4], 0
    %s9 = scalar_lea.sflag [#allocation4], 1
    %10 = vsyncpa %s9, 0
    %11 = vsyncpa [#allocation7], 0
    %s12 = scalar_lea.sflag [#allocation7], 1
    %13 = vsyncpa %s12, 0
    %14 = vsyncpa [#allocation5], 0
    %s15 = scalar_lea.sflag [#allocation5], 1
    %16 = vsyncpa %s15, 0
    loop: start=0, step=1, limit=6
    $region2: #{_xverse_mlp_call.1} parent=1 // loop_pre_header
      _
    $region3: #{_xverse_mlp_call.1} parent=1 // loop_header
      %s18 = sphi 0, %s22
      %p19 = scmp.ge.s32.totalorder %s18, 6
      %s25 = sphi 0, %s37
      %s26 = sphi 0, %s33
      %s27 = sphi 0, %s25
      %s28 = sphi 0, %s26
      %s29 = sphi 0, %s27
      %s30 = sphi 0, %s28
      %s40 = sphi 0, %s42
      %s43 = sphi 0, %s40
      %s44 = sphi 0, %s43
      %s60 = sphi 0, %s44
      %s66 = sphi 0, %s68
      %s69 = sphi 0, %s66
      %s70 = sphi 0, %s69
      %s86 = sphi 0, %s70
      %s92 = sphi 0, %s94
      %s95 = sphi 0, %s92
      %s96 = sphi 0, %s95
      %s112 = sphi 0, %s96
      %s118 = sphi 0, %s120
      %s121 = sphi 0, %s118
      %s122 = sphi 0, %s121
      %s138 = sphi 0, %s122
    $region4: #{_xverse_mlp_call.1} parent=1 // loop_header_branch
      %21 = sbr.rel (%p19) target = $region8
    $region5: #{_xverse_mlp_call.1} parent=1 // loop_body
      %s23 = ssub.s32 %s18, 1
      %s24 = ssub.s32 %s18, 2
      %s31 = sadd.s32 1, %s26
      %p32 = scmp.ge.s32.totalorder %s31, 2
      %s33 = scalar_select %p32, 0, %s31
      %s34 = sadd.s32 1, %s25
      %s35 = scalar_select %p32, %s34, %s25
      %p36 = scmp.ge.s32.totalorder %s35, 2
      %s37 = scalar_select %p36, 0, %s35
      %s38 = ssub.s32 %s25, %s37
      %p39 = scmp.eq.s32.totalorder %s38, 0
      %s41 = sadd.s32 %s40, 1
      %s42 = scalar_select %p39, %s40, %s41
      %p45 = pneg %p39
      %p46 = scmp.eq.s32.totalorder %s18, 3
      %p47 = por %p45, %p46
      %p48 = scmp.ne.s32.totalorder %s40, %s43
      %p49 = scmp.eq.s32.totalorder %s18, 0
      %p50 = por %p48, %p49
      %p51 = scmp.ne.s32.totalorder %s40, %s43
      %p52 = scmp.eq.s32.totalorder %s23, 3
      %p53 = por %p51, %p52
      %p54 = scmp.ne.s32.totalorder %s43, %s44
      %p55 = scmp.eq.s32.totalorder %s23, 0
      %p56 = por %p54, %p55
      %p57 = scmp.ne.s32.totalorder %s43, %s44
      %p58 = scmp.eq.s32.totalorder %s24, 3
      %p59 = por %p57, %p58
      %p61 = scmp.ne.s32.totalorder %s44, %s60
      %p62 = scmp.eq.s32.totalorder %s24, 0
      %p63 = por %p61, %p62
      %s64 = ssub.s32 %s26, %s33
      %p65 = scmp.eq.s32.totalorder %s64, 0
      %s67 = sadd.s32 %s66, 1
      %s68 = scalar_select %p65, %s66, %s67
      %p71 = pneg %p65
      %p72 = scmp.eq.s32.totalorder %s18, 3
      %p73 = por %p71, %p72
      %p74 = scmp.ne.s32.totalorder %s66, %s69
      %p75 = scmp.eq.s32.totalorder %s18, 0
      %p76 = por %p74, %p75
      %p77 = scmp.ne.s32.totalorder %s66, %s69
      %p78 = scmp.eq.s32.totalorder %s23, 3
      %p79 = por %p77, %p78
      %p80 = scmp.ne.s32.totalorder %s69, %s70
      %p81 = scmp.eq.s32.totalorder %s23, 0
      %p82 = por %p80, %p81
      %p83 = scmp.ne.s32.totalorder %s69, %s70
      %p84 = scmp.eq.s32.totalorder %s24, 3
      %p85 = por %p83, %p84
      %p87 = scmp.ne.s32.totalorder %s70, %s86
      %p88 = scmp.eq.s32.totalorder %s24, 0
      %p89 = por %p87, %p88
      %s90 = ssub.s32 %s26, %s33
      %p91 = scmp.eq.s32.totalorder %s90, 0
      %s93 = sadd.s32 %s92, 1
      %s94 = scalar_select %p91, %s92, %s93
      %p97 = pneg %p91
      %p98 = scmp.eq.s32.totalorder %s18, 3
      %p99 = por %p97, %p98
      %p100 = scmp.ne.s32.totalorder %s92, %s95
      %p101 = scmp.eq.s32.totalorder %s18, 0
      %p102 = por %p100, %p101
      %p103 = scmp.ne.s32.totalorder %s92, %s95
      %p104 = scmp.eq.s32.totalorder %s23, 3
      %p105 = por %p103, %p104
      %p106 = scmp.ne.s32.totalorder %s95, %s96
      %p107 = scmp.eq.s32.totalorder %s23, 0
      %p108 = por %p106, %p107
      %p109 = scmp.ne.s32.totalorder %s95, %s96
      %p110 = scmp.eq.s32.totalorder %s24, 3
      %p111 = por %p109, %p110
      %p113 = scmp.ne.s32.totalorder %s96, %s112
      %p114 = scmp.eq.s32.totalorder %s24, 0
      %p115 = por %p113, %p114
      %s116 = ssub.s32 %s25, %s37
      %p117 = scmp.eq.s32.totalorder %s116, 0
      %s119 = sadd.s32 %s118, 1
      %s120 = scalar_select %p117, %s118, %s119
      %p123 = pneg %p117
      %p124 = scmp.eq.s32.totalorder %s18, 3
      %p125 = por %p123, %p124
      %p126 = scmp.ne.s32.totalorder %s118, %s121
      %p127 = scmp.eq.s32.totalorder %s18, 0
      %p128 = por %p126, %p127
      %p129 = scmp.ne.s32.totalorder %s118, %s121
      %p130 = scmp.eq.s32.totalorder %s23, 3
      %p131 = por %p129, %p130
      %p132 = scmp.ne.s32.totalorder %s121, %s122
      %p133 = scmp.eq.s32.totalorder %s23, 0
      %p134 = por %p132, %p133
      %p135 = scmp.ne.s32.totalorder %s121, %s122
      %p136 = scmp.eq.s32.totalorder %s24, 3
      %p137 = por %p135, %p136
      %p139 = scmp.ne.s32.totalorder %s122, %s138
      %p140 = scmp.eq.s32.totalorder %s24, 0
      %p141 = por %p139, %p140
      %p142 = scmp.le.s32.totalorder 1, %s18
      %p143 = scmp.lt.s32.totalorder %s18, 5
      %p144 = pnand %p142, %p143
      %p145 = pneg %p144
      // Predicated region
      $region9: #{_xverse_mlp_call.1} parent=5 // pred_check
        _
      $region10: #{_xverse_mlp_call.1} parent=5 // pred_check_branch
        %147 = sbr.rel (%p144) target = $region12
      $region11: #{_xverse_mlp_call.1} parent=5 // pred_region
        %s148 = ssub.s32 %s18, 1
      $region12: #{_xverse_mlp_call.1} parent=5 // pred_fallthru
        _
      %p149 = scmp.lt.s32.totalorder %s18, 4
      // Predicated region
      $region13: #{_xverse_mlp_call.1} parent=5 // pred_check
        %p150 = pneg %p149
      $region14: #{_xverse_mlp_call.1} parent=5 // pred_check_branch
        %152 = sbr.rel (%p150) target = $region16
      $region15: #{_xverse_mlp_call.1} parent=5 // pred_region
        // Predicated region
        $region17: #{_xverse_mlp_call.1} parent=15 // pred_check
          %p153 = pneg %p50
        $region18: #{_xverse_mlp_call.1} parent=15 // pred_check_branch
          %155 = sbr.rel (%p153) target = $region20
        $region19: #{_xverse_mlp_call.1} parent=15 // pred_region
          %s156 = sand.u32 %s40, 1
          %s157 = scalar_lea.sflag [#allocation4], %s156
          %s158 = sand.u32 %s40, 1
          %s159 = smul.addr %s158, 8
          %s160 = scalar_lea.vmem [#allocation3], %s159
          %s162 = ssub.s32 128, 128
          %163 = vsyncadd %s157, %s162
          %s164 = smul.addr %s25, 128
          %s165 = scalar_lea.hbm %s0, %s164
          %s167 = sshll.u32 %s160, 4
          %s168 = int_to_ptr.vmem [resolvable:$true] %s167
          %170 = dma.hbm_to_vmem [thread:$0]  %s165, 128, %s168, %s157
        $region20: #{_xverse_mlp_call.1} parent=15 // pred_fallthru
          _
        // Predicated region
        $region21: #{_xverse_mlp_call.1} parent=15 // pred_check
          %p171 = pneg %p76
        $region22: #{_xverse_mlp_call.1} parent=15 // pred_check_branch
          %173 = sbr.rel (%p171) target = $region24
        $region23: #{_xverse_mlp_call.1} parent=15 // pred_region
          %s174 = sand.u32 %s18, 1
          %s175 = scalar_lea.sflag [#allocation7], %s174
          %s176 = sand.u32 %s66, 1
          %s177 = smul.addr %s176, 256
          %s178 = scalar_lea.vmem [#allocation6], %s177
          %s180 = ssub.s32 4096, 4096
          %181 = vsyncadd %s175, %s180
          %s182 = smul.addr %s26, 32
          %s183 = smul.addr %s182, 128
          %s184 = scalar_lea.hbm %s1, %s183
          %s185 = sshll.u32 %s178, 4
          %s186 = int_to_ptr.vmem [resolvable:$true] %s185
          %191 = dma.hbm_to_vmem [thread:$0]  %s184, 4096, %s186, %s175, 256, 256, 16
        $region24: #{_xverse_mlp_call.1} parent=15 // pred_fallthru
          _
        // Predicated region
        $region25: #{_xverse_mlp_call.1} parent=15 // pred_check
          %p192 = pneg %p102
        $region26: #{_xverse_mlp_call.1} parent=15 // pred_check_branch
          %194 = sbr.rel (%p192) target = $region28
        $region27: #{_xverse_mlp_call.1} parent=15 // pred_region
          %s195 = sand.u32 %s18, 1
          %s196 = scalar_lea.sflag [#allocation7], %s195
          %s197 = sand.u32 %s92, 1
          %s198 = smul.addr %s197, 128
          %s199 = scalar_lea.vmem [#allocation8], %s198
          %s201 = ssub.s32 2048, 2048
          %202 = vsyncadd %s196, %s201
          %s203 = smul.addr %s26, 16
          %s204 = smul.addr %s203, 128
          %s205 = scalar_lea.hbm %s2, %s204
          %s206 = sshll.u32 %s199, 4
          %s207 = int_to_ptr.vmem [resolvable:$true] %s206
          %212 = dma.hbm_to_vmem [thread:$0]  %s205, 2048, %s207, %s196, 128, 128, 8
        $region28: #{_xverse_mlp_call.1} parent=15 // pred_fallthru
          _
      $region16: #{_xverse_mlp_call.1} parent=5 // pred_fallthru
        _
      %p213 = scmp.le.s32.totalorder 1, %s18
      %p214 = scmp.lt.s32.totalorder %s18, 5
      %p215 = pnand %p213, %p214
      %p216 = pneg %p215
      // Predicated region
      $region29: #{_xverse_mlp_call.1} parent=5 // pred_check
        _
      $region30: #{_xverse_mlp_call.1} parent=5 // pred_check_branch
        %218 = sbr.rel (%p215) target = $region32
      $region31: #{_xverse_mlp_call.1} parent=5 // pred_region
        %s219 = ssub.s32 %s18, 1
        %s220 = sand.u32 %s43, 1
        %s221 = scalar_lea.sflag [#allocation4], %s220
        %s222 = sand.u32 %s43, 1
        %s223 = smul.addr %s222, 8
        %s224 = scalar_lea.vmem [#allocation3], %s223
        // Predicated region
        $region33: #{_xverse_mlp_call.1} parent=31 // pred_check
          %p225 = pneg %p56
        $region34: #{_xverse_mlp_call.1} parent=31 // pred_check_branch
          %227 = sbr.rel (%p225) target = $region36
        $region35: #{_xverse_mlp_call.1} parent=31 // pred_region
          %228 = dma.done %s221, 128
        $region36: #{_xverse_mlp_call.1} parent=31 // pred_fallthru
          _
        %s229 = sand.u32 %s23, 1
        %s230 = scalar_lea.sflag [#allocation7], %s229
        %s231 = sand.u32 %s69, 1
        %s232 = smul.addr %s231, 256
        %s233 = scalar_lea.vmem [#allocation6], %s232
        // Predicated region
        $region37: #{_xverse_mlp_call.1} parent=31 // pred_check
          %p234 = pneg %p82
        $region38: #{_xverse_mlp_call.1} parent=31 // pred_check_branch
          %236 = sbr.rel (%p234) target = $region40
        $region39: #{_xverse_mlp_call.1} parent=31 // pred_region
          %237 = dma.done %s230, 4096
        $region40: #{_xverse_mlp_call.1} parent=31 // pred_fallthru
          _
        %s238 = sand.u32 %s23, 1
        %s239 = scalar_lea.sflag [#allocation7], %s238
        %s240 = sand.u32 %s95, 1
        %s241 = smul.addr %s240, 128
        %s242 = scalar_lea.vmem [#allocation8], %s241
        // Predicated region
        $region41: #{_xverse_mlp_call.1} parent=31 // pred_check
          %p243 = pneg %p108
        $region42: #{_xverse_mlp_call.1} parent=31 // pred_check_branch
          %245 = sbr.rel (%p243) target = $region44
        $region43: #{_xverse_mlp_call.1} parent=31 // pred_region
          %246 = dma.done %s239, 2048
        $region44: #{_xverse_mlp_call.1} parent=31 // pred_fallthru
          _
        %s247 = sand.u32 %s43, 1
        %s248 = scalar_lea.sflag [#allocation4], %s247
        %s249 = sand.u32 %s43, 1
        %s250 = smul.addr %s249, 8
        %s251 = scalar_lea.vmem [#allocation3], %s250
        %p252 = pneg %p56
        %p253 = pneg %p53
        %s254 = sand.u32 %s23, 1
        %s255 = scalar_lea.sflag [#allocation7], %s254
        %s256 = sand.u32 %s69, 1
        %s257 = smul.addr %s256, 256
        %s258 = scalar_lea.vmem [#allocation6], %s257
        %p259 = pneg %p82
        %p260 = pneg %p79
        %s261 = sand.u32 %s23, 1
        %s262 = scalar_lea.sflag [#allocation7], %s261
        %s263 = sand.u32 %s95, 1
        %s264 = smul.addr %s263, 128
        %s265 = scalar_lea.vmem [#allocation8], %s264
        %p266 = pneg %p108
        %p267 = pneg %p105
        %p268 = pneg %p134
        %p269 = pneg %p131
        %s270 = sand.u32 %s121, 1
        %s271 = scalar_lea.sflag [#allocation5], %s270
        %s272 = sand.u32 %s121, 1
        %s273 = smul.addr %s272, 8
        %s274 = scalar_lea.vmem [#allocation9], %s273
        %p275 = scmp.eq.s32.totalorder %s28, 0
        // Predicated region
        $region45: #{_xverse_mlp_call.1} parent=31 // pred_check
          %p276 = pneg %p275
        $region46: #{_xverse_mlp_call.1} parent=31 // pred_check_branch
          %278 = sbr.rel (%p276) target = $region48
        $region47: #{_xverse_mlp_call.1} parent=31 // pred_region
          %279 = vst [vmem:[#allocation2] sm:$0xff] 0.0
        $region48: #{_xverse_mlp_call.1} parent=31 // pred_fallthru
          _
        %v280 = vld [vmem:[%s224] sm:$0xff]
        %v281 = vld [vmem:[%s233] sm:$0xff]
        %v282 = vld [vmem:[%s233 + $0x8] sm:$0xff]
        %v283 = vld [vmem:[%s233 + $0x10] sm:$0xff]
        %v284 = vld [vmem:[%s233 + $0x18] sm:$0xff]
        %v285 = vld [vmem:[%s233 + $0x20] sm:$0xff]
        %v286 = vld [vmem:[%s233 + $0x28] sm:$0xff]
        %v287 = vld [vmem:[%s233 + $0x30] sm:$0xff]
        %v288 = vld [vmem:[%s233 + $0x38] sm:$0xff]
        %v289 = vld [vmem:[%s233 + $0x40] sm:$0xff]
        %v290 = vld [vmem:[%s233 + $0x48] sm:$0xff]
        %v291 = vld [vmem:[%s233 + $0x50] sm:$0xff]
        %v292 = vld [vmem:[%s233 + $0x58] sm:$0xff]
        %v293 = vld [vmem:[%s233 + $0x60] sm:$0xff]
        %v294 = vld [vmem:[%s233 + $0x68] sm:$0xff]
        %v295 = vld [vmem:[%s233 + $0x70] sm:$0xff]
        %v296 = vld [vmem:[%s233 + $0x78] sm:$0xff]
        %v297 = vld [vmem:[%s233 + $0x80] sm:$0xff]
        %v298 = vld [vmem:[%s233 + $0x88] sm:$0xff]
        %v299 = vld [vmem:[%s233 + $0x90] sm:$0xff]
        %v300 = vld [vmem:[%s233 + $0x98] sm:$0xff]
        %v301 = vld [vmem:[%s233 + $0xa0] sm:$0xff]
        %v302 = vld [vmem:[%s233 + $0xa8] sm:$0xff]
        %v303 = vld [vmem:[%s233 + $0xb0] sm:$0xff]
        %v304 = vld [vmem:[%s233 + $0xb8] sm:$0xff]
        %v305 = vld [vmem:[%s233 + $0xc0] sm:$0xff]
        %v306 = vld [vmem:[%s233 + $0xc8] sm:$0xff]
        %v307 = vld [vmem:[%s233 + $0xd0] sm:$0xff]
        %v308 = vld [vmem:[%s233 + $0xd8] sm:$0xff]
        %v309 = vld [vmem:[%s233 + $0xe0] sm:$0xff]
        %v310 = vld [vmem:[%s233 + $0xe8] sm:$0xff]
        %v311 = vld [vmem:[%s233 + $0xf0] sm:$0xff]
        %v312 = vld [vmem:[%s233 + $0xf8] sm:$0xff]
        %313 = vmatprep.subr.mxu0 %v282
        %314 = vmatpush1.msra.mxu0 %v281
        %315 = vmatprep.subr.mxu0 %v284
        %316 = vmatpush1.msra.mxu0 %v283
        %317 = vmatprep.subr.mxu0 %v286
        %318 = vmatpush1.msra.mxu0 %v285
        %319 = vmatprep.subr.mxu0 %v288
        %320 = vmatpush1.msra.mxu0 %v287
        %321 = vmatprep.subr.mxu0 %v290
        %322 = vmatpush1.msra.mxu0 %v289
        %323 = vmatprep.subr.mxu0 %v292
        %324 = vmatpush1.msra.mxu0 %v291
        %325 = vmatprep.subr.mxu0 %v294
        %326 = vmatpush1.msra.mxu0 %v293
        %327 = vmatprep.subr.mxu0 %v296
        %328 = vmatpush1.msra.mxu0 %v295
        %329 = vmatprep.subr.mxu0 %v298
        %330 = vmatpush1.msra.mxu0 %v297
        %331 = vmatprep.subr.mxu0 %v300
        %332 = vmatpush1.msra.mxu0 %v299
        %333 = vmatprep.subr.mxu0 %v302
        %334 = vmatpush1.msra.mxu0 %v301
        %335 = vmatprep.subr.mxu0 %v304
        %336 = vmatpush1.msra.mxu0 %v303
        %337 = vmatprep.subr.mxu0 %v306
        %338 = vmatpush1.msra.mxu0 %v305
        %339 = vmatprep.subr.mxu0 %v308
        %340 = vmatpush1.msra.mxu0 %v307
        %341 = vmatprep.subr.mxu0 %v310
        %342 = vmatpush1.msra.mxu0 %v309
        %343 = vmatprep.subr.mxu0 %v312
        %344 = vmatpush1.msra.mxu0 %v311
        %345 = vmatprep.subr.mxu0 0.0
        %346 = vmatpush1.msra.mxu0 0.0
        %347 = vmatprep.subr.mxu0 0.0
        %348 = vmatpush1.msra.mxu0 0.0
        %349 = vmatprep.subr.mxu0 0.0
        %350 = vmatpush1.msra.mxu0 0.0
        %351 = vmatprep.subr.mxu0 0.0
        %352 = vmatpush1.msra.mxu0 0.0
        %353 = vmatprep.subr.mxu0 0.0
        %354 = vmatpush1.msra.mxu0 0.0
        %355 = vmatprep.subr.mxu0 0.0
        %356 = vmatpush1.msra.mxu0 0.0
        %357 = vmatprep.subr.mxu0 0.0
        %358 = vmatpush1.msra.mxu0 0.0
        %359 = vmatprep.subr.mxu0 0.0
        %360 = vmatpush1.msra.mxu0 0.0
        %361 = vmatprep.subr.mxu0 0.0
        %362 = vmatpush1.msra.mxu0 0.0
        %363 = vmatprep.subr.mxu0 0.0
        %364 = vmatpush1.msra.mxu0 0.0
        %365 = vmatprep.subr.mxu0 0.0
        %366 = vmatpush1.msra.mxu0 0.0
        %367 = vmatprep.subr.mxu0 0.0
        %368 = vmatpush1.msra.mxu0 0.0
        %369 = vmatprep.subr.mxu0 0.0
        %370 = vmatpush1.msra.mxu0 0.0
        %371 = vmatprep.subr.mxu0 0.0
        %372 = vmatpush1.msra.mxu0 0.0
        %373 = vmatprep.subr.mxu0 0.0
        %374 = vmatpush1.msra.mxu0 0.0
        %375 = vmatprep.subr.mxu0 0.0
        %376 = vmatpush1.msra.mxu0 0.0
        %377 = vmatprep.mubr.f32.mxu0 0.0
        %378 = vmatmul.mubr.f32.gmra.mrb[0].mxu0 %v280
        %v379 = vpop.f32.mrb[0].mxu0
        %v380 = vadd.f32 0.0, %v379
        %v381 = vpop.f32.mrb[0].mxu0
        %v382 = vadd.f32 0.0, %v381
        %383 = vdwg.mxu0
        %v384 = vxor.u32 %v380, 2147483648
        %v385 = vmul.f32 %v384, 1.442695
        %v386 = vpow.pop %v385
        %v387 = vadd.f32 %v386, 1.0
        %v388 = vrcp.pop %v387
        %v389 = vmul.f32 1.0, %v388
        %v390 = vmul.f32 %v380, %v389
        %v391 = vmul.f32 %v390, %v382
        %v392 = vld [vmem:[#allocation2] sm:$0xff]
        %v393 = vld [vmem:[%s242] sm:$0xff]
        %v394 = vld [vmem:[%s242 + $0x8] sm:$0xff]
        %v395 = vld [vmem:[%s242 + $0x10] sm:$0xff]
        %v396 = vld [vmem:[%s242 + $0x18] sm:$0xff]
        %v397 = vld [vmem:[%s242 + $0x20] sm:$0xff]
        %v398 = vld [vmem:[%s242 + $0x28] sm:$0xff]
        %v399 = vld [vmem:[%s242 + $0x30] sm:$0xff]
        %v400 = vld [vmem:[%s242 + $0x38] sm:$0xff]
        %v401 = vld [vmem:[%s242 + $0x40] sm:$0xff]
        %v402 = vld [vmem:[%s242 + $0x48] sm:$0xff]
        %v403 = vld [vmem:[%s242 + $0x50] sm:$0xff]
        %v404 = vld [vmem:[%s242 + $0x58] sm:$0xff]
        %v405 = vld [vmem:[%s242 + $0x60] sm:$0xff]
        %v406 = vld [vmem:[%s242 + $0x68] sm:$0xff]
        %v407 = vld [vmem:[%s242 + $0x70] sm:$0xff]
        %v408 = vld [vmem:[%s242 + $0x78] sm:$0xff]
        %409 = vmatprep.subr.mxu0 0.0
        %410 = vmatpush1.msra.mxu0 %v393
        %411 = vmatprep.subr.mxu0 0.0
        %412 = vmatpush1.msra.mxu0 %v394
        %413 = vmatprep.subr.mxu0 0.0
        %414 = vmatpush1.msra.mxu0 %v395
        %415 = vmatprep.subr.mxu0 0.0
        %416 = vmatpush1.msra.mxu0 %v396
        %417 = vmatprep.subr.mxu0 0.0
        %418 = vmatpush1.msra.mxu0 %v397
        %419 = vmatprep.subr.mxu0 0.0
        %420 = vmatpush1.msra.mxu0 %v398
        %421 = vmatprep.subr.mxu0 0.0
        %422 = vmatpush1.msra.mxu0 %v399
        %423 = vmatprep.subr.mxu0 0.0
        %424 = vmatpush1.msra.mxu0 %v400
        %425 = vmatprep.subr.mxu0 0.0
        %426 = vmatpush1.msra.mxu0 %v401
        %427 = vmatprep.subr.mxu0 0.0
        %428 = vmatpush1.msra.mxu0 %v402
        %429 = vmatprep.subr.mxu0 0.0
        %430 = vmatpush1.msra.mxu0 %v403
        %431 = vmatprep.subr.mxu0 0.0
        %432 = vmatpush1.msra.mxu0 %v404
        %433 = vmatprep.subr.mxu0 0.0
        %434 = vmatpush1.msra.mxu0 %v405
        %435 = vmatprep.subr.mxu0 0.0
        %436 = vmatpush1.msra.mxu0 %v406
        %437 = vmatprep.subr.mxu0 0.0
        %438 = vmatpush1.msra.mxu0 %v407
        %439 = vmatprep.subr.mxu0 0.0
        %440 = vmatpush1.msra.mxu0 %v408
        %441 = vmatprep.subr.mxu0 0.0
        %442 = vmatpush1.msra.mxu0 0.0
        %443 = vmatprep.subr.mxu0 0.0
        %444 = vmatpush1.msra.mxu0 0.0
        %445 = vmatprep.subr.mxu0 0.0
        %446 = vmatpush1.msra.mxu0 0.0
        %447 = vmatprep.subr.mxu0 0.0
        %448 = vmatpush1.msra.mxu0 0.0
        %449 = vmatprep.subr.mxu0 0.0
        %450 = vmatpush1.msra.mxu0 0.0
        %451 = vmatprep.subr.mxu0 0.0
        %452 = vmatpush1.msra.mxu0 0.0
        %453 = vmatprep.subr.mxu0 0.0
        %454 = vmatpush1.msra.mxu0 0.0
        %455 = vmatprep.subr.mxu0 0.0
        %456 = vmatpush1.msra.mxu0 0.0
        %457 = vmatprep.subr.mxu0 0.0
        %458 = vmatpush1.msra.mxu0 0.0
        %459 = vmatprep.subr.mxu0 0.0
        %460 = vmatpush1.msra.mxu0 0.0
        %461 = vmatprep.subr.mxu0 0.0
        %462 = vmatpush1.msra.mxu0 0.0
        %463 = vmatprep.subr.mxu0 0.0
        %464 = vmatpush1.msra.mxu0 0.0
        %465 = vmatprep.subr.mxu0 0.0
        %466 = vmatpush1.msra.mxu0 0.0
        %467 = vmatprep.subr.mxu0 0.0
        %468 = vmatpush1.msra.mxu0 0.0
        %469 = vmatprep.subr.mxu0 0.0
        %470 = vmatpush1.msra.mxu0 0.0
        %471 = vmatprep.subr.mxu0 0.0
        %472 = vmatpush1.msra.mxu0 0.0
        %473 = vmatprep.mubr.f32.mxu0 0.0
        %474 = vmatmul.mubr.f32.gmra.mrb[0].mxu0 %v391
        %v475 = vpop.f32.mrb[0].mxu0
        %v476 = vadd.f32 0.0, %v475
        %v477 = vpop.f32.mrb[0].mxu0
        %478 = vdwg.mxu0
        %v479 = vadd.f32 %v392, %v476
        %480 = vst [vmem:[#allocation2] sm:$0xff] %v479
        %p481 = scmp.eq.s32.totalorder %s28, 1
        // Predicated region
        $region49: #{_xverse_mlp_call.1} parent=31 // pred_check
          %p482 = pneg %p481
        $region50: #{_xverse_mlp_call.1} parent=31 // pred_check_branch
          %484 = sbr.rel (%p482) target = $region52
        $region51: #{_xverse_mlp_call.1} parent=31 // pred_region
          %v485 = vld [vmem:[#allocation2] sm:$0xff]
          %486 = vst [vmem:[%s274] sm:$0xff] %v485
        $region52: #{_xverse_mlp_call.1} parent=31 // pred_fallthru
          _
        %s487 = sand.u32 %s121, 1
        %s488 = scalar_lea.sflag [#allocation5], %s487
        %s489 = sand.u32 %s121, 1
        %s490 = smul.addr %s489, 8
        %s491 = scalar_lea.vmem [#allocation9], %s490
        // Predicated region
        $region53: #{_xverse_mlp_call.1} parent=31 // pred_check
          %p492 = pneg %p131
        $region54: #{_xverse_mlp_call.1} parent=31 // pred_check_branch
          %494 = sbr.rel (%p492) target = $region56
        $region55: #{_xverse_mlp_call.1} parent=31 // pred_region
          %s496 = ssub.s32 128, 128
          %497 = vsyncadd %s488, %s496
          %s498 = smul.addr %s27, 128
          %s499 = scalar_lea.hbm %s3, %s498
          %s501 = sshll.u32 %s491, 4
          %s502 = int_to_ptr.vmem [resolvable:$true] %s501
          %504 = dma.vmem_to_hbm [thread:$0]  %s502, 128, %s499, %s488
        $region56: #{_xverse_mlp_call.1} parent=31 // pred_fallthru
          _
      $region32: #{_xverse_mlp_call.1} parent=5 // pred_fallthru
        _
      %p505 = scmp.le.s32.totalorder 2, %s18
      // Predicated region
      $region57: #{_xverse_mlp_call.1} parent=5 // pred_check
        %p506 = pneg %p505
      $region58: #{_xverse_mlp_call.1} parent=5 // pred_check_branch
        %508 = sbr.rel (%p506) target = $region60
      $region59: #{_xverse_mlp_call.1} parent=5 // pred_region
        %s509 = ssub.s32 %s18, 2
        // Predicated region
        $region61: #{_xverse_mlp_call.1} parent=59 // pred_check
          %p510 = pneg %p137
        $region62: #{_xverse_mlp_call.1} parent=59 // pred_check_branch
          %512 = sbr.rel (%p510) target = $region64
        $region63: #{_xverse_mlp_call.1} parent=59 // pred_region
          %s513 = sand.u32 %s122, 1
          %s514 = scalar_lea.sflag [#allocation5], %s513
          %s515 = sand.u32 %s122, 1
          %s516 = smul.addr %s515, 8
          %s517 = scalar_lea.vmem [#allocation9], %s516
          %518 = dma.done %s514, 128
        $region64: #{_xverse_mlp_call.1} parent=59 // pred_fallthru
          _
      $region60: #{_xverse_mlp_call.1} parent=5 // pred_fallthru
        _
    $region6: #{_xverse_mlp_call.1} parent=1 // loop_footer
      %s22 = sadd.s32 1, %s18
    $region7: #{_xverse_mlp_call.1} parent=1 // loop_footer_branch
      %17 = sbr.rel target = $region3
    $region8: #{_xverse_mlp_call.1} parent=1 // loop_exit
      _
    %519 = vsyncpa [#allocation4], 1
    %s520 = scalar_lea.sflag [#allocation4], 1
    %521 = vsyncpa %s520, 1
    %522 = vsyncpa [#allocation7], 1
    %s523 = scalar_lea.sflag [#allocation7], 1
    %524 = vsyncpa %s523, 1
    %525 = vsyncpa [#allocation5], 1
    %s526 = scalar_lea.sflag [#allocation5], 1
    %527 = vsyncpa %s526, 1

</llo_original>
